<compile_context>
chip_gen: v5e
topology: v5e:2x2
jax: 0.10.0
libtpu: 0.0.40
codegen_flags: <defaults>
</compile_context>

<pallas_src>
import functools

import jax
import jax.numpy as jnp
from jax.experimental import pallas as pl
from jax.experimental.pallas import tpu as pltpu


def _round_up(x, m):
    return ((x + m - 1) // m) * m


def _vae_encoder_kernel(n_hidden, tile_b, valid_batch, out_pad, *refs):
    # ref layout:
    #   x, (W_i, b_i) * n_hidden, W_head, b_head, eps   -> inputs
    #   z_ref, kld_partial_ref                          -> outputs
    n_in = 1 + 2 * n_hidden + 2 + 1
    in_refs = refs[:n_in]
    z_ref, kld_ref = refs[n_in], refs[n_in + 1]

    idx = 0
    h_mm = in_refs[idx][...]          # matmul dtype (bf16), already padded
    mm_dtype = h_mm.dtype
    idx += 1

    # MLP hot path: MXU matmuls (bf16 in, f32 accumulate), bias+ReLU in f32.
    for _ in range(n_hidden):
        w = in_refs[idx][...]
        b = in_refs[idx + 1][...]
        idx += 2
        h = jnp.dot(h_mm, w, preferred_element_type=jnp.float32) + b
        h = jnp.maximum(h, 0.0)
        h_mm = h.astype(mm_dtype)

    w_head = in_refs[idx][...]        # [hidden_pad, 2*out_pad]  (mu | logvar)
    b_head = in_refs[idx + 1][...]    # [1, 2*out_pad]
    eps = in_refs[idx + 2][...].astype(jnp.float32)

    # Fused mu/logvar head: one lane-dense matmul, then static 128-aligned slices.
    head = jnp.dot(h_mm, w_head, preferred_element_type=jnp.float32) + b_head
    mu = head[:, :out_pad]
    logvar = head[:, out_pad:]

    # Reparameterize: one transcendental per element.
    e = jnp.exp(logvar)
    std = jnp.sqrt(e)
    z_ref[...] = (eps * std + mu).astype(z_ref.dtype)

    # KLD per-lane partial sums, masked to valid batch rows. Padded feature
    # lanes contribute exactly 0 (1 + 0 - 0 - exp(0) == 0) by construction.
    term = 1.0 + logvar - mu * mu - e
    row = jax.lax.broadcasted_iota(jnp.int32, (tile_b, 1), 0) + pl.program_id(0) * tile_b
    term = jnp.where(row < valid_batch, term, 0.0)
    kld_ref[...] = jnp.sum(term, axis=0, keepdims=True)


def variational_encoder_forward(x, params, eps, *,
                                matmul_dtype=jnp.bfloat16, batch_tile=1024):
    """params: dict with 'hidden' = [(W,b), ...], 'mu' = (W,b), 'logvar' = (W,b).

    Weight layout is [in_features, out_features] so the kernel computes
    x @ W + b (equivalent to PyTorch's x @ W.T with W:[out,in]).
    """
    hidden = params["hidden"]
    w_mu, b_mu = params["mu"]
    w_lv, b_lv = params["logvar"]
    n_hidden = len(hidden)
    out_dim = w_mu.shape[1]
    batch, in_dim = x.shape

    # Batch tiling: pad batch to a multiple of the tile (>= 8 sublanes).
    if batch <= batch_tile:
        tile_b = _round_up(batch, 8)
        b_pad = tile_b
    else:
        tile_b = batch_tile
        b_pad = _round_up(batch, tile_b)
    n_tiles = b_pad // tile_b

    # Feature padding to multiples of 128 (lane-dense MXU ops and stores).
    in_pad = _round_up(in_dim, 128)
    out_pad = _round_up(out_dim, 128)

    def pad2(a, rows, cols, dtype):
        a = a.astype(dtype)
        return jnp.pad(a, ((0, rows - a.shape[0]), (0, cols - a.shape[1])))

    x_p = pad2(x, b_pad, in_pad, matmul_dtype)
    eps_p = pad2(eps, b_pad, out_pad, jnp.float32)

    inputs = [x_p]
    in_specs = [pl.BlockSpec((tile_b, in_pad), lambda i: (i, 0))]

    d_prev = in_pad
    hid_pads = []
    for w, b in hidden:
        hp = _round_up(w.shape[1], 128)
        hid_pads.append(hp)
        inputs += [pad2(w, d_prev, hp, matmul_dtype),
                   pad2(b.reshape(1, -1), 1, hp, jnp.float32)]
        in_specs += [pl.BlockSpec((d_prev, hp), lambda i: (0, 0)),     # resident
                     pl.BlockSpec((1, hp), lambda i: (0, 0))]          # resident
        d_prev = hp

    # Fused mu/logvar head: [hidden_pad, 2*out_pad], each half padded to 128.
    w_head = jnp.concatenate(
        [pad2(w_mu, d_prev, out_pad, matmul_dtype),
         pad2(w_lv, d_prev, out_pad, matmul_dtype)], axis=1)
    b_head = jnp.concatenate(
        [pad2(b_mu.reshape(1, -1), 1, out_pad, jnp.float32),
         pad2(b_lv.reshape(1, -1), 1, out_pad, jnp.float32)], axis=1)
    inputs += [w_head, b_head, eps_p]
    in_specs += [pl.BlockSpec((d_prev, 2 * out_pad), lambda i: (0, 0)),
                 pl.BlockSpec((1, 2 * out_pad), lambda i: (0, 0)),
                 pl.BlockSpec((tile_b, out_pad), lambda i: (i, 0))]

    out_shape = (
        jax.ShapeDtypeStruct((b_pad, out_pad), jnp.float32),     # z (padded)
        jax.ShapeDtypeStruct((n_tiles, out_pad), jnp.float32),   # KLD partials
    )
    out_specs = (
        pl.BlockSpec((tile_b, out_pad), lambda i: (i, 0)),
        pl.BlockSpec((1, out_pad), lambda i: (i, 0)),
    )

    kernel = functools.partial(_vae_encoder_kernel, n_hidden, tile_b, batch, out_pad)

    # Advisory cost estimate (helps XLA scheduling at small sizes).
    dims = [in_pad] + hid_pads
    flops = 2 * b_pad * (sum(dims[k] * dims[k + 1] for k in range(len(dims) - 1))
                         + d_prev * 2 * out_pad)
    bytes_accessed = sum(int(a.size) * a.dtype.itemsize for a in inputs) \
        + b_pad * out_pad * 4 + n_tiles * out_pad * 4
    cost = pl.CostEstimate(flops=flops,
                           transcendentals=b_pad * out_pad,
                           bytes_accessed=bytes_accessed)

    z_p, kld_partials = pl.pallas_call(
        kernel,
        out_shape=out_shape,
        grid=(n_tiles,),
        in_specs=in_specs,
        out_specs=out_specs,
        compiler_params=pltpu.CompilerParams(
            dimension_semantics=("parallel",)),
        cost_estimate=cost,
    )(*inputs)

    z = z_p[:batch, :out_dim]
    loss = -0.5 * jnp.sum(kld_partials) / jnp.float32(out_dim)
    return z, loss


def init_params(key, input_dim, hidden_dims):
    """Deterministic synthetic parameters (shapes match the PyTorch module)."""
    params = {"hidden": []}
    d = input_dim
    for h in hidden_dims:
        key, k1, k2 = jax.random.split(key, 3)
        bound = 1.0 / (d ** 0.5)
        w = jax.random.uniform(k1, (d, h), jnp.float32, -bound, bound)
        b = jax.random.uniform(k2, (h,), jnp.float32, -bound, bound)
        params["hidden"].append((w, b))
        d = h
    out_dim = hidden_dims[-1]
    bound = 1.0 / (out_dim ** 0.5)
    key, k1, k2, k3, k4 = jax.random.split(key, 5)
    params["mu"] = (
        jax.random.uniform(k1, (out_dim, out_dim), jnp.float32, -bound, bound),
        jax.random.uniform(k2, (out_dim,), jnp.float32, -bound, bound),
    )
    params["logvar"] = (
        jax.random.uniform(k3, (out_dim, out_dim), jnp.float32, -bound, bound),
        jax.random.uniform(k4, (out_dim,), jnp.float32, -bound, bound),
    )
    return params


if __name__ == "__main__":
    batch = 8
    input_dim = 32
    hidden_dims = [64, 32]

    key = jax.random.PRNGKey(0)
    key, kx, keps, kp = jax.random.split(key, 4)

    x = jax.random.normal(kx, (batch, input_dim), jnp.float32)
    eps = jax.random.normal(keps, (batch, hidden_dims[-1]), jnp.float32)
    params = init_params(kp, input_dim, hidden_dims)

    z, loss = variational_encoder_forward(x, params, eps)
    jax.block_until_ready((z, loss))

    # Pure-JAX reference with the same bf16-matmul / f32-accumulate policy.
    mm = jnp.bfloat16
    h = x.astype(mm)
    for w, b in params["hidden"]:
        hf = jnp.dot(h, w.astype(mm), preferred_element_type=jnp.float32) + b
        hf = jnp.maximum(hf, 0.0)
        h = hf.astype(mm)
    mu_ref = jnp.dot(h, params["mu"][0].astype(mm),
                     preferred_element_type=jnp.float32) + params["mu"][1]
    lv_ref = jnp.dot(h, params["logvar"][0].astype(mm),
                     preferred_element_type=jnp.float32) + params["logvar"][1]
    z_ref = eps * jnp.exp(0.5 * lv_ref) + mu_ref
    loss_ref = (-0.5 * jnp.sum(1.0 + lv_ref - mu_ref ** 2 - jnp.exp(lv_ref))
                / hidden_dims[-1])

    assert jnp.allclose(z, z_ref, atol=2e-4, rtol=2e-4), "z mismatch"
    assert jnp.allclose(loss, loss_ref, atol=2e-3, rtol=1e-3), "loss mismatch"

    print("KERNEL_OK")
</pallas_src>

<mosaic_0001>
module attributes {stable_mosaic.version = 11 : i64} {
  func.func @_vae_encoder_kernel(%arg0: i32, %arg1: memref<8x128xbf16, #tpu.memory_space<vmem>>, %arg2: memref<128x128xbf16, #tpu.memory_space<vmem>>, %arg3: memref<1x128xf32, #tpu.memory_space<vmem>>, %arg4: memref<128x128xbf16, #tpu.memory_space<vmem>>, %arg5: memref<1x128xf32, #tpu.memory_space<vmem>>, %arg6: memref<128x256xbf16, #tpu.memory_space<vmem>>, %arg7: memref<1x256xf32, #tpu.memory_space<vmem>>, %arg8: memref<8x128xf32, #tpu.memory_space<vmem>>, %arg9: memref<8x128xf32, #tpu.memory_space<vmem>>, %arg10: memref<1x128xf32, #tpu.memory_space<vmem>>) attributes {dimension_semantics = [#tpu.dimension_semantics<parallel>], iteration_bounds = array<i64: 1>, scalar_prefetch = 0 : i64, scratch_operands = 0 : i64, tpu.core_type = #tpu.core_type<tc>, window_params = [{transform_indices = @transform_0, window_bounds = array<i64: 8, 128>}, {pipeline_mode = #tpu.pipeline_mode<synchronous>, transform_indices = @transform_1, window_bounds = array<i64: 128, 128>}, {pipeline_mode = #tpu.pipeline_mode<synchronous>, transform_indices = @transform_2, window_bounds = array<i64: 1, 128>}, {pipeline_mode = #tpu.pipeline_mode<synchronous>, transform_indices = @transform_3, window_bounds = array<i64: 128, 128>}, {pipeline_mode = #tpu.pipeline_mode<synchronous>, transform_indices = @transform_4, window_bounds = array<i64: 1, 128>}, {pipeline_mode = #tpu.pipeline_mode<synchronous>, transform_indices = @transform_5, window_bounds = array<i64: 128, 256>}, {pipeline_mode = #tpu.pipeline_mode<synchronous>, transform_indices = @transform_6, window_bounds = array<i64: 1, 256>}, {transform_indices = @transform_7, window_bounds = array<i64: 8, 128>}, {transform_indices = @transform_8, window_bounds = array<i64: 8, 128>}, {transform_indices = @transform_9, window_bounds = array<i64: 1, 128>}]} {
    %c0 = arith.constant 0 : index
    %c0_0 = arith.constant 0 : index
    %0 = vector.load %arg1[%c0, %c0_0] : memref<8x128xbf16, #tpu.memory_space<vmem>>, vector<8x128xbf16>
    %c0_1 = arith.constant 0 : index
    %c0_2 = arith.constant 0 : index
    %1 = vector.load %arg2[%c0_1, %c0_2] : memref<128x128xbf16, #tpu.memory_space<vmem>>, vector<128x128xbf16>
    %c0_3 = arith.constant 0 : index
    %c0_4 = arith.constant 0 : index
    %2 = vector.load %arg3[%c0_3, %c0_4] : memref<1x128xf32, #tpu.memory_space<vmem>>, vector<1x128xf32>
    %cst = arith.constant dense<0.000000e+00> : vector<8x128xf32>
    %3 = tpu.matmul %0, %1, %cst {dimension_numbers = #tpu.dot_dimension_numbers<[1], [0], [0], [1], [0, 0, 1, 1], [], []>} : vector<8x128xbf16>, vector<128x128xbf16>, vector<8x128xf32> -> vector<8x128xf32>
    %4 = vector.broadcast %2 : vector<1x128xf32> to vector<8x128xf32>
    %5 = arith.addf %3, %4 : vector<8x128xf32>
    %cst_5 = arith.constant 0.000000e+00 : f32
    %6 = vector.broadcast %cst_5 : f32 to vector<8x128xf32>
    %7 = arith.maximumf %5, %6 : vector<8x128xf32>
    %8 = arith.truncf %7 : vector<8x128xf32> to vector<8x128xbf16>
    %c0_6 = arith.constant 0 : index
    %c0_7 = arith.constant 0 : index
    %9 = vector.load %arg4[%c0_6, %c0_7] : memref<128x128xbf16, #tpu.memory_space<vmem>>, vector<128x128xbf16>
    %c0_8 = arith.constant 0 : index
    %c0_9 = arith.constant 0 : index
    %10 = vector.load %arg5[%c0_8, %c0_9] : memref<1x128xf32, #tpu.memory_space<vmem>>, vector<1x128xf32>
    %cst_10 = arith.constant dense<0.000000e+00> : vector<8x128xf32>
    %11 = tpu.matmul %8, %9, %cst_10 {dimension_numbers = #tpu.dot_dimension_numbers<[1], [0], [0], [1], [0, 0, 1, 1], [], []>} : vector<8x128xbf16>, vector<128x128xbf16>, vector<8x128xf32> -> vector<8x128xf32>
    %12 = vector.broadcast %10 : vector<1x128xf32> to vector<8x128xf32>
    %13 = arith.addf %11, %12 : vector<8x128xf32>
    %cst_11 = arith.constant 0.000000e+00 : f32
    %14 = vector.broadcast %cst_11 : f32 to vector<8x128xf32>
    %15 = arith.maximumf %13, %14 : vector<8x128xf32>
    %16 = arith.truncf %15 : vector<8x128xf32> to vector<8x128xbf16>
    %c0_12 = arith.constant 0 : index
    %c0_13 = arith.constant 0 : index
    %17 = vector.load %arg6[%c0_12, %c0_13] : memref<128x256xbf16, #tpu.memory_space<vmem>>, vector<128x256xbf16>
    %c0_14 = arith.constant 0 : index
    %c0_15 = arith.constant 0 : index
    %18 = vector.load %arg7[%c0_14, %c0_15] : memref<1x256xf32, #tpu.memory_space<vmem>>, vector<1x256xf32>
    %c0_16 = arith.constant 0 : index
    %c0_17 = arith.constant 0 : index
    %19 = vector.load %arg8[%c0_16, %c0_17] : memref<8x128xf32, #tpu.memory_space<vmem>>, vector<8x128xf32>
    %cst_18 = arith.constant dense<0.000000e+00> : vector<8x256xf32>
    %20 = tpu.matmul %16, %17, %cst_18 {dimension_numbers = #tpu.dot_dimension_numbers<[1], [0], [0], [1], [0, 0, 1, 1], [], []>} : vector<8x128xbf16>, vector<128x256xbf16>, vector<8x256xf32> -> vector<8x256xf32>
    %21 = vector.broadcast %18 : vector<1x256xf32> to vector<8x256xf32>
    %22 = arith.addf %20, %21 : vector<8x256xf32>
    %23 = vector.extract_strided_slice %22 {offsets = [0, 0], sizes = [8, 128], strides = [1, 1]} : vector<8x256xf32> to vector<8x128xf32>
    %24 = vector.extract_strided_slice %22 {offsets = [0, 128], sizes = [8, 128], strides = [1, 1]} : vector<8x256xf32> to vector<8x128xf32>
    %25 = math.exp %24 : vector<8x128xf32>
    %26 = math.sqrt %25 : vector<8x128xf32>
    %27 = arith.mulf %19, %26 : vector<8x128xf32>
    %28 = arith.addf %27, %23 : vector<8x128xf32>
    %c0_19 = arith.constant 0 : index
    %c0_20 = arith.constant 0 : index
    %29 = vector.load %arg9[%c0_19, %c0_20] : memref<8x128xf32, #tpu.memory_space<vmem>>, vector<8x128xf32>
    tpu.vector_store %arg9[%c0_19, %c0_20], %28 {strides = array<i32>} : memref<8x128xf32, #tpu.memory_space<vmem>>, vector<8x128xf32>,
    %cst_21 = arith.constant 1.000000e+00 : f32
    %30 = vector.broadcast %cst_21 : f32 to vector<8x128xf32>
    %31 = arith.addf %30, %24 : vector<8x128xf32>
    %32 = arith.mulf %23, %23 : vector<8x128xf32>
    %33 = arith.subf %31, %32 : vector<8x128xf32>
    %34 = arith.subf %33, %25 : vector<8x128xf32>
    %35 = tpu.iota {dimensions = array<i32: 0>} : vector<8x1xi32>
    %c8_i32 = arith.constant 8 : i32
    %36 = arith.muli %arg0, %c8_i32 : i32
    %37 = vector.broadcast %36 : i32 to vector<8x1xi32>
    %38 = arith.addi %35, %37 : vector<8x1xi32>
    %c8_i32_22 = arith.constant 8 : i32
    %39 = vector.broadcast %c8_i32_22 : i32 to vector<8x1xi32>
    %40 = arith.cmpi slt, %38, %39 : vector<8x1xi32>
    %cst_23 = arith.constant 0.000000e+00 : f32
    %41 = vector.shape_cast %40 : vector<8x1xi1> to vector<8x1xi1>
    %42 = vector.broadcast %41 : vector<8x1xi1> to vector<8x128xi1>
    %43 = vector.broadcast %cst_23 : f32 to vector<8x128xf32>
    %44 = arith.select %42, %34, %43 : vector<8x128xi1>, vector<8x128xf32>
    %cst_24 = arith.constant dense<0.000000e+00> : vector<128xf32>
    %45 = vector.multi_reduction <add>, %44, %cst_24 [0] : vector<8x128xf32> to vector<128xf32>
    %46 = vector.shape_cast %45 : vector<128xf32> to vector<1x128xf32>
    %c0_25 = arith.constant 0 : index
    %c0_26 = arith.constant 0 : index
    %47 = vector.load %arg10[%c0_25, %c0_26] : memref<1x128xf32, #tpu.memory_space<vmem>>, vector<1x128xf32>
    tpu.vector_store %arg10[%c0_25, %c0_26], %46 {strides = array<i32>} : memref<1x128xf32, #tpu.memory_space<vmem>>, vector<1x128xf32>,
    return
  }
  func.func @transform_0(%arg0: i32) -> (i32, i32) {
    %c0_i32 = arith.constant 0 : i32
    %c0_i32_0 = arith.constant 0 : i32
    return %arg0, %c0_i32 : i32, i32
  }
  func.func @transform_1(%arg0: i32) -> (i32, i32) {
    %c0_i32 = arith.constant 0 : i32
    %c0_i32_0 = arith.constant 0 : i32
    %c0_i32_1 = arith.constant 0 : i32
    return %c0_i32, %c0_i32_0 : i32, i32
  }
  func.func @transform_2(%arg0: i32) -> (i32, i32) {
    %c0_i32 = arith.constant 0 : i32
    %c0_i32_0 = arith.constant 0 : i32
    %c0_i32_1 = arith.constant 0 : i32
    return %c0_i32, %c0_i32_0 : i32, i32
  }
  func.func @transform_3(%arg0: i32) -> (i32, i32) {
    %c0_i32 = arith.constant 0 : i32
    %c0_i32_0 = arith.constant 0 : i32
    %c0_i32_1 = arith.constant 0 : i32
    return %c0_i32, %c0_i32_0 : i32, i32
  }
  func.func @transform_4(%arg0: i32) -> (i32, i32) {
    %c0_i32 = arith.constant 0 : i32
    %c0_i32_0 = arith.constant 0 : i32
    %c0_i32_1 = arith.constant 0 : i32
    return %c0_i32, %c0_i32_0 : i32, i32
  }
  func.func @transform_5(%arg0: i32) -> (i32, i32) {
    %c0_i32 = arith.constant 0 : i32
    %c0_i32_0 = arith.constant 0 : i32
    %c0_i32_1 = arith.constant 0 : i32
    return %c0_i32, %c0_i32_0 : i32, i32
  }
  func.func @transform_6(%arg0: i32) -> (i32, i32) {
    %c0_i32 = arith.constant 0 : i32
    %c0_i32_0 = arith.constant 0 : i32
    %c0_i32_1 = arith.constant 0 : i32
    return %c0_i32, %c0_i32_0 : i32, i32
  }
  func.func @transform_7(%arg0: i32) -> (i32, i32) {
    %c0_i32 = arith.constant 0 : i32
    %c0_i32_0 = arith.constant 0 : i32
    return %arg0, %c0_i32 : i32, i32
  }
  func.func @transform_8(%arg0: i32) -> (i32, i32) {
    %c0_i32 = arith.constant 0 : i32
    %c0_i32_0 = arith.constant 0 : i32
    return %arg0, %c0_i32 : i32, i32
  }
  func.func @transform_9(%arg0: i32) -> (i32, i32) {
    %c0_i32 = arith.constant 0 : i32
    %c0_i32_0 = arith.constant 0 : i32
    return %arg0, %c0_i32 : i32, i32
  }
}

</mosaic_0001>

<llo_original>
// kernel: tpu_custom_call.1
$region0: #{tpu_custom_call.1}
  #allocation0 [shape = 'u32[]', space=smem, size = 0x4, offset = 0x4, fixed_abs, tag = 'smem constant byte address 0x4 - core index']
  #allocation1 [shape = 'u32[72,128]{1,0:T(1,128)}', space=vmem, size = 0x9000, scoped, tag = 'internal scratch']
  %s0 = inlined_call_operand.hbm [shape: bf16[8,128], index: 0, kind: input, shape index: {}]
  %s1 = inlined_call_operand.hbm [shape: bf16[128,128], index: 1, kind: input, shape index: {}]
  %s2 = inlined_call_operand.vmem [shape: f32[1,128], index: 2, kind: input, shape index: {}]
  %s3 = inlined_call_operand.hbm [shape: bf16[128,128], index: 3, kind: input, shape index: {}]
  %s4 = inlined_call_operand.hbm [shape: f32[1,128], index: 4, kind: input, shape index: {}]
  %s5 = inlined_call_operand.hbm [shape: bf16[128,256], index: 5, kind: input, shape index: {}]
  %s6 = inlined_call_operand.vmem [shape: f32[1,256], index: 6, kind: input, shape index: {}]
  %s7 = inlined_call_operand.hbm [shape: f32[8,128], index: 7, kind: input, shape index: {}]
  %s8 = inlined_call_operand.hbm [shape: f32[8,128], index: 8, kind: output, shape index: {0}]
  %s9 = inlined_call_operand.hbm [shape: f32[1,128], index: 9, kind: output, shape index: {1}]
  %10 = xla_tuple %s8, %s9
  %s11 = sld [smem:[#allocation0]]
  $region74: #{tpu_custom_call.1} parent=0
    _
  %s13 = ssub.s32 1, %s11
  %s14 = scalar_select 0, %s13, %s11
  $region1: #{tpu_custom_call.1} parent=0
    #allocation2 [shape = 'u8[2048]{0}', space=vmem, size = 0x800, scoped, tag = 'input window, operand 0, single buffered']
    #allocation3 [shape = 's32[1]{0}', space=sflag, size = 0x4, scoped, tag = 'scoped memory for tpu_custom_call.1']
    #allocation4 [shape = 's32[1]{0}', space=sflag, size = 0x4, scoped, tag = 'scoped memory for tpu_custom_call.1']
    #allocation5 [shape = 'u8[32768]{0}', space=vmem, size = 0x8000, scoped, tag = 'input window, operand 1, single buffered']
    #allocation6 [shape = 's32[1]{0}', space=sflag, size = 0x4, scoped, tag = 'scoped memory for tpu_custom_call.1']
    #allocation7 [shape = 'u8[32768]{0}', space=vmem, size = 0x8000, scoped, tag = 'input window, operand 3, single buffered']
    #allocation8 [shape = 'u8[512]{0}', space=vmem, size = 0x400, scoped, tag = 'input window, operand 4, single buffered']
    #allocation9 [shape = 's32[1]{0}', space=sflag, size = 0x4, scoped, tag = 'scoped memory for tpu_custom_call.1']
    #allocation10 [shape = 'u8[65536]{0}', space=vmem, size = 0x10000, scoped, tag = 'input window, operand 5, single buffered']
    #allocation11 [shape = 'u8[4096]{0}', space=vmem, size = 0x1000, scoped, tag = 'input window, operand 7, single buffered']
    #allocation12 [shape = 's32[1]{0}', space=sflag, size = 0x4, scoped, tag = 'scoped memory for tpu_custom_call.1']
    #allocation13 [shape = 'u8[4096]{0}', space=vmem, size = 0x1000, scoped, tag = 'output window, operand 0, single buffered']
    #allocation14 [shape = 'u8[512]{0}', space=vmem, size = 0x400, scoped, tag = 'output window, operand 1, single buffered']
    #allocation15 [shape = 's32[1]{0}', space=sflag, size = 0x4, scoped, tag = 'scoped memory for tpu_custom_call.1']
    %15 = vsyncpa [#allocation3], 0
    %16 = vsyncpa [#allocation6], 0
    %17 = vsyncpa [#allocation9], 0
    %18 = vsyncpa [#allocation12], 0
    %19 = vsyncpa [#allocation4], 0
    %20 = vsyncpa [#allocation15], 0
    // Predicated region
    $region2: #{tpu_custom_call.1} parent=1 // pred_check
      _
    $region3: #{tpu_custom_call.1} parent=1 // pred_check_branch
      %22 = sbr.rel (0) target = $region5
    $region4: #{tpu_custom_call.1} parent=1 // pred_region
      %24 = vsyncadd [#allocation3], 0
      %s26 = sshll.u32 %s0, 4
      %s27 = int_to_ptr.hbm [resolvable:$true] %s26
      %s28 = sshll.u32 [#allocation2], 4
      %s29 = int_to_ptr.vmem [resolvable:$true] %s28
      %31 = dma.hbm_to_vmem [thread:$0]  %s27, 64, %s29, [#allocation3]
    $region5: #{tpu_custom_call.1} parent=1 // pred_fallthru
      _
    // Predicated region
    $region6: #{tpu_custom_call.1} parent=1 // pred_check
      _
    $region7: #{tpu_custom_call.1} parent=1 // pred_check_branch
      %33 = sbr.rel (0) target = $region9
    $region8: #{tpu_custom_call.1} parent=1 // pred_region
      %35 = vsyncadd [#allocation6], 0
      %s36 = sshll.u32 %s1, 4
      %s37 = int_to_ptr.hbm [resolvable:$true] %s36
      %s38 = sshll.u32 [#allocation5], 4
      %s39 = int_to_ptr.vmem [resolvable:$true] %s38
      %44 = dma.hbm_to_vmem [thread:$0]  %s37, 1024, %s39, [#allocation6], 64, 64, 4
    $region9: #{tpu_custom_call.1} parent=1 // pred_fallthru
      _
    // Predicated region
    $region10: #{tpu_custom_call.1} parent=1 // pred_check
      _
    $region11: #{tpu_custom_call.1} parent=1 // pred_check_branch
      %46 = sbr.rel (0) target = $region13
    $region12: #{tpu_custom_call.1} parent=1 // pred_region
      _
    $region13: #{tpu_custom_call.1} parent=1 // pred_fallthru
      _
    // Predicated region
    $region14: #{tpu_custom_call.1} parent=1 // pred_check
      _
    $region15: #{tpu_custom_call.1} parent=1 // pred_check_branch
      %48 = sbr.rel (0) target = $region17
    $region16: #{tpu_custom_call.1} parent=1 // pred_region
      %50 = vsyncadd [#allocation6], 0
      %s51 = sshll.u32 %s3, 4
      %s52 = int_to_ptr.hbm [resolvable:$true] %s51
      %s53 = sshll.u32 [#allocation7], 4
      %s54 = int_to_ptr.vmem [resolvable:$true] %s53
      %59 = dma.hbm_to_vmem [thread:$0]  %s52, 1024, %s54, [#allocation6], 64, 64, 4
    $region17: #{tpu_custom_call.1} parent=1 // pred_fallthru
      _
    // Predicated region
    $region18: #{tpu_custom_call.1} parent=1 // pred_check
      _
    $region19: #{tpu_custom_call.1} parent=1 // pred_check_branch
      %61 = sbr.rel (0) target = $region21
    $region20: #{tpu_custom_call.1} parent=1 // pred_region
      %63 = vsyncadd [#allocation9], 0
      %s65 = sshll.u32 %s4, 4
      %s66 = int_to_ptr.hbm [resolvable:$true] %s65
      %s67 = sshll.u32 [#allocation8], 4
      %s68 = int_to_ptr.vmem [resolvable:$true] %s67
      %70 = dma.hbm_to_vmem [thread:$0]  %s66, 16, %s68, [#allocation9]
    $region21: #{tpu_custom_call.1} parent=1 // pred_fallthru
      _
    // Predicated region
    $region22: #{tpu_custom_call.1} parent=1 // pred_check
      _
    $region23: #{tpu_custom_call.1} parent=1 // pred_check_branch
      %72 = sbr.rel (0) target = $region25
    $region24: #{tpu_custom_call.1} parent=1 // pred_region
      %74 = vsyncadd [#allocation9], 0
      %s75 = sshll.u32 %s5, 4
      %s76 = int_to_ptr.hbm [resolvable:$true] %s75
      %s77 = sshll.u32 [#allocation10], 4
      %s78 = int_to_ptr.vmem [resolvable:$true] %s77
      %83 = dma.hbm_to_vmem [thread:$0]  %s76, 2048, %s78, [#allocation9], 128, 128, 8
    $region25: #{tpu_custom_call.1} parent=1 // pred_fallthru
      _
    // Predicated region
    $region26: #{tpu_custom_call.1} parent=1 // pred_check
      _
    $region27: #{tpu_custom_call.1} parent=1 // pred_check_branch
      %85 = sbr.rel (0) target = $region29
    $region28: #{tpu_custom_call.1} parent=1 // pred_region
      _
    $region29: #{tpu_custom_call.1} parent=1 // pred_fallthru
      _
    // Predicated region
    $region30: #{tpu_custom_call.1} parent=1 // pred_check
      _
    $region31: #{tpu_custom_call.1} parent=1 // pred_check_branch
      %87 = sbr.rel (0) target = $region33
    $region32: #{tpu_custom_call.1} parent=1 // pred_region
      %89 = vsyncadd [#allocation12], 0
      %s91 = sshll.u32 %s7, 4
      %s92 = int_to_ptr.hbm [resolvable:$true] %s91
      %s93 = sshll.u32 [#allocation11], 4
      %s94 = int_to_ptr.vmem [resolvable:$true] %s93
      %96 = dma.hbm_to_vmem [thread:$0]  %s92, 128, %s94, [#allocation12]
    $region33: #{tpu_custom_call.1} parent=1 // pred_fallthru
      _
    // Predicated region
    $region34: #{tpu_custom_call.1} parent=1 // pred_check
      _
    $region35: #{tpu_custom_call.1} parent=1 // pred_check_branch
      %98 = sbr.rel (0) target = $region37
    $region36: #{tpu_custom_call.1} parent=1 // pred_region
      %100 = dma.done [#allocation3], 64
    $region37: #{tpu_custom_call.1} parent=1 // pred_fallthru
      _
    // Predicated region
    $region38: #{tpu_custom_call.1} parent=1 // pred_check
      _
    $region39: #{tpu_custom_call.1} parent=1 // pred_check_branch
      %102 = sbr.rel (0) target = $region41
    $region40: #{tpu_custom_call.1} parent=1 // pred_region
      %104 = dma.done [#allocation6], 1024
    $region41: #{tpu_custom_call.1} parent=1 // pred_fallthru
      _
    // Predicated region
    $region42: #{tpu_custom_call.1} parent=1 // pred_check
      _
    $region43: #{tpu_custom_call.1} parent=1 // pred_check_branch
      %106 = sbr.rel (0) target = $region45
    $region44: #{tpu_custom_call.1} parent=1 // pred_region
      %108 = dma.done [#allocation6], 1024
    $region45: #{tpu_custom_call.1} parent=1 // pred_fallthru
      _
    // Predicated region
    $region46: #{tpu_custom_call.1} parent=1 // pred_check
      _
    $region47: #{tpu_custom_call.1} parent=1 // pred_check_branch
      %110 = sbr.rel (0) target = $region49
    $region48: #{tpu_custom_call.1} parent=1 // pred_region
      %112 = dma.done [#allocation9], 16
    $region49: #{tpu_custom_call.1} parent=1 // pred_fallthru
      _
    // Predicated region
    $region50: #{tpu_custom_call.1} parent=1 // pred_check
      _
    $region51: #{tpu_custom_call.1} parent=1 // pred_check_branch
      %114 = sbr.rel (0) target = $region53
    $region52: #{tpu_custom_call.1} parent=1 // pred_region
      %116 = dma.done [#allocation9], 2048
    $region53: #{tpu_custom_call.1} parent=1 // pred_fallthru
      _
    // Predicated region
    $region54: #{tpu_custom_call.1} parent=1 // pred_check
      _
    $region55: #{tpu_custom_call.1} parent=1 // pred_check_branch
      %118 = sbr.rel (0) target = $region57
    $region56: #{tpu_custom_call.1} parent=1 // pred_region
      %120 = dma.done [#allocation12], 128
    $region57: #{tpu_custom_call.1} parent=1 // pred_fallthru
      _
    %v121 = vld [vmem:[#allocation2] sm:$0xf]
    %v122 = vld [vmem:[#allocation5] sm:$0xf]
    %v123 = vld [vmem:[#allocation5 + $0x4] sm:$0xf]
    %v124 = vld [vmem:[#allocation5 + $0x8] sm:$0xf]
    %v125 = vld [vmem:[#allocation5 + $0xc] sm:$0xf]
    %v126 = vld [vmem:[#allocation5 + $0x10] sm:$0xf]
    %v127 = vld [vmem:[#allocation5 + $0x14] sm:$0xf]
    %v128 = vld [vmem:[#allocation5 + $0x18] sm:$0xf]
    %v129 = vld [vmem:[#allocation5 + $0x1c] sm:$0xf]
    %v130 = vld [vmem:[#allocation5 + $0x20] sm:$0xf]
    %v131 = vld [vmem:[#allocation5 + $0x24] sm:$0xf]
    %v132 = vld [vmem:[#allocation5 + $0x28] sm:$0xf]
    %v133 = vld [vmem:[#allocation5 + $0x2c] sm:$0xf]
    %v134 = vld [vmem:[#allocation5 + $0x30] sm:$0xf]
    %v135 = vld [vmem:[#allocation5 + $0x34] sm:$0xf]
    %v136 = vld [vmem:[#allocation5 + $0x38] sm:$0xf]
    %v137 = vld [vmem:[#allocation5 + $0x3c] sm:$0xf]
    %v138 = vld [vmem:[%s2] sm:$0x1]
    %v140 = vperm.slane %v138, 0
    %v158 = vunpack.c.l.b16 %v122
    %v159 = vunpack.c.l.b16 %v123
    %v160 = vunpack.c.l.b16 %v124
    %v161 = vunpack.c.l.b16 %v125
    %v162 = vunpack.c.l.b16 %v126
    %v163 = vunpack.c.l.b16 %v127
    %v164 = vunpack.c.l.b16 %v128
    %v165 = vunpack.c.l.b16 %v129
    %v166 = vunpack.c.l.b16 %v130
    %v167 = vunpack.c.l.b16 %v131
    %v168 = vunpack.c.l.b16 %v132
    %v169 = vunpack.c.l.b16 %v133
    %v170 = vunpack.c.l.b16 %v134
    %v171 = vunpack.c.l.b16 %v135
    %v172 = vunpack.c.l.b16 %v136
    %v173 = vunpack.c.l.b16 %v137
    %v174 = vpack.c.b16 %v159, %v158
    %v175 = vpack.c.b16 %v161, %v160
    %v176 = vpack.c.b16 %v163, %v162
    %v177 = vpack.c.b16 %v165, %v164
    %v178 = vpack.c.b16 %v167, %v166
    %v179 = vpack.c.b16 %v169, %v168
    %v180 = vpack.c.b16 %v171, %v170
    %v181 = vpack.c.b16 %v173, %v172
    %190 = vmatpush.bf16.msra.mxu0 %v181
    %191 = vmatpush.bf16.msra.mxu0 %v180
    %192 = vmatpush.bf16.msra.mxu0 %v179
    %193 = vmatpush.bf16.msra.mxu0 %v178
    %194 = vmatpush.bf16.msra.mxu0 %v177
    %195 = vmatpush.bf16.msra.mxu0 %v176
    %196 = vmatpush.bf16.msra.mxu0 %v175
    %197 = vmatpush.bf16.msra.mxu0 %v174
    %198 = vmatmul.bf16.gmra.mxu0 %v121
    %v199 = vpop.f32.mrf.mxu0
    %v200 = vadd.f32 %v140, %v199
    %v201 = vpop.f32.mrf.mxu0
    %202 = vdwg.mxu0
    %v203 = vmax.f32 %v200, 0.0
    %v204 = vpack.c.bf16 %v203, %v203
    %v205 = vld [vmem:[#allocation7] sm:$0xf]
    %v206 = vld [vmem:[#allocation7 + $0x4] sm:$0xf]
    %v207 = vld [vmem:[#allocation7 + $0x8] sm:$0xf]
    %v208 = vld [vmem:[#allocation7 + $0xc] sm:$0xf]
    %v209 = vld [vmem:[#allocation7 + $0x10] sm:$0xf]
    %v210 = vld [vmem:[#allocation7 + $0x14] sm:$0xf]
    %v211 = vld [vmem:[#allocation7 + $0x18] sm:$0xf]
    %v212 = vld [vmem:[#allocation7 + $0x1c] sm:$0xf]
    %v213 = vld [vmem:[#allocation7 + $0x20] sm:$0xf]
    %v214 = vld [vmem:[#allocation7 + $0x24] sm:$0xf]
    %v215 = vld [vmem:[#allocation7 + $0x28] sm:$0xf]
    %v216 = vld [vmem:[#allocation7 + $0x2c] sm:$0xf]
    %v217 = vld [vmem:[#allocation7 + $0x30] sm:$0xf]
    %v218 = vld [vmem:[#allocation7 + $0x34] sm:$0xf]
    %v219 = vld [vmem:[#allocation7 + $0x38] sm:$0xf]
    %v220 = vld [vmem:[#allocation7 + $0x3c] sm:$0xf]
    %v221 = vld [vmem:[#allocation8] sm:$0x1]
    %v223 = vperm.slane %v221, 0
    %v241 = vunpack.c.l.b16 %v205
    %v242 = vunpack.c.l.b16 %v206
    %v243 = vunpack.c.l.b16 %v207
    %v244 = vunpack.c.l.b16 %v208
    %v245 = vunpack.c.l.b16 %v209
    %v246 = vunpack.c.l.b16 %v210
    %v247 = vunpack.c.l.b16 %v211
    %v248 = vunpack.c.l.b16 %v212
    %v249 = vunpack.c.l.b16 %v213
    %v250 = vunpack.c.l.b16 %v214
    %v251 = vunpack.c.l.b16 %v215
    %v252 = vunpack.c.l.b16 %v216
    %v253 = vunpack.c.l.b16 %v217
    %v254 = vunpack.c.l.b16 %v218
    %v255 = vunpack.c.l.b16 %v219
    %v256 = vunpack.c.l.b16 %v220
    %v257 = vpack.c.b16 %v242, %v241
    %v258 = vpack.c.b16 %v244, %v243
    %v259 = vpack.c.b16 %v246, %v245
    %v260 = vpack.c.b16 %v248, %v247
    %v261 = vpack.c.b16 %v250, %v249
    %v262 = vpack.c.b16 %v252, %v251
    %v263 = vpack.c.b16 %v254, %v253
    %v264 = vpack.c.b16 %v256, %v255
    %273 = vmatpush.bf16.msra.mxu0 %v264
    %274 = vmatpush.bf16.msra.mxu0 %v263
    %275 = vmatpush.bf16.msra.mxu0 %v262
    %276 = vmatpush.bf16.msra.mxu0 %v261
    %277 = vmatpush.bf16.msra.mxu0 %v260
    %278 = vmatpush.bf16.msra.mxu0 %v259
    %279 = vmatpush.bf16.msra.mxu0 %v258
    %280 = vmatpush.bf16.msra.mxu0 %v257
    %281 = vmatmul.bf16.gmra.mxu0 %v204
    %v282 = vpop.f32.mrf.mxu0
    %v283 = vadd.f32 %v223, %v282
    %v284 = vpop.f32.mrf.mxu0
    %285 = vdwg.mxu0
    %v286 = vmax.f32 %v283, 0.0
    %v287 = vpack.c.bf16 %v286, %v286
    %v288 = vld [vmem:[#allocation10] sm:$0xff]
    %v289 = vld [vmem:[#allocation10 + $0x8] sm:$0xff]
    %v290 = vld [vmem:[#allocation10 + $0x10] sm:$0xff]
    %v291 = vld [vmem:[#allocation10 + $0x18] sm:$0xff]
    %v292 = vld [vmem:[#allocation10 + $0x20] sm:$0xff]
    %v293 = vld [vmem:[#allocation10 + $0x28] sm:$0xff]
    %v294 = vld [vmem:[#allocation10 + $0x30] sm:$0xff]
    %v295 = vld [vmem:[#allocation10 + $0x38] sm:$0xff]
    %v296 = vld [vmem:[#allocation10 + $0x40] sm:$0xff]
    %v297 = vld [vmem:[#allocation10 + $0x48] sm:$0xff]
    %v298 = vld [vmem:[#allocation10 + $0x50] sm:$0xff]
    %v299 = vld [vmem:[#allocation10 + $0x58] sm:$0xff]
    %v300 = vld [vmem:[#allocation10 + $0x60] sm:$0xff]
    %v301 = vld [vmem:[#allocation10 + $0x68] sm:$0xff]
    %v302 = vld [vmem:[#allocation10 + $0x70] sm:$0xff]
    %v303 = vld [vmem:[#allocation10 + $0x78] sm:$0xff]
    %v304 = vld [vmem:[%s6] sm:$0x3]
    %v305 = vld [vmem:[#allocation11] sm:$0xff]
    %v307 = vperm.slane %v304, 0
    %v308 = vperm.slane %v304, 1
    %v327 = vunpack.c.l.b16 %v288
    %v328 = vunpack.c.h.b16 %v288
    %v329 = vunpack.c.l.b16 %v289
    %v330 = vunpack.c.h.b16 %v289
    %v331 = vunpack.c.l.b16 %v290
    %v332 = vunpack.c.h.b16 %v290
    %v333 = vunpack.c.l.b16 %v291
    %v334 = vunpack.c.h.b16 %v291
    %v335 = vunpack.c.l.b16 %v292
    %v336 = vunpack.c.h.b16 %v292
    %v337 = vunpack.c.l.b16 %v293
    %v338 = vunpack.c.h.b16 %v293
    %v339 = vunpack.c.l.b16 %v294
    %v340 = vunpack.c.h.b16 %v294
    %v341 = vunpack.c.l.b16 %v295
    %v342 = vunpack.c.h.b16 %v295
    %v343 = vunpack.c.l.b16 %v296
    %v344 = vunpack.c.h.b16 %v296
    %v345 = vunpack.c.l.b16 %v297
    %v346 = vunpack.c.h.b16 %v297
    %v347 = vunpack.c.l.b16 %v298
    %v348 = vunpack.c.h.b16 %v298
    %v349 = vunpack.c.l.b16 %v299
    %v350 = vunpack.c.h.b16 %v299
    %v351 = vunpack.c.l.b16 %v300
    %v352 = vunpack.c.h.b16 %v300
    %v353 = vunpack.c.l.b16 %v301
    %v354 = vunpack.c.h.b16 %v301
    %v355 = vunpack.c.l.b16 %v302
    %v356 = vunpack.c.h.b16 %v302
    %v357 = vunpack.c.l.b16 %v303
    %v358 = vunpack.c.h.b16 %v303
    %v359 = vpack.c.b16 %v329, %v327
    %v360 = vpack.c.b16 %v330, %v328
    %v361 = vpack.c.b16 %v333, %v331
    %v362 = vpack.c.b16 %v334, %v332
    %v363 = vpack.c.b16 %v337, %v335
    %v364 = vpack.c.b16 %v338, %v336
    %v365 = vpack.c.b16 %v341, %v339
    %v366 = vpack.c.b16 %v342, %v340
    %v367 = vpack.c.b16 %v345, %v343
    %v368 = vpack.c.b16 %v346, %v344
    %v369 = vpack.c.b16 %v349, %v347
    %v370 = vpack.c.b16 %v350, %v348
    %v371 = vpack.c.b16 %v353, %v351
    %v372 = vpack.c.b16 %v354, %v352
    %v373 = vpack.c.b16 %v357, %v355
    %v374 = vpack.c.b16 %v358, %v356
    %391 = vmatpush.bf16.msra.mxu0 %v373
    %392 = vmatpush.bf16.msra.mxu0 %v371
    %393 = vmatpush.bf16.msra.mxu0 %v369
    %394 = vmatpush.bf16.msra.mxu0 %v367
    %395 = vmatpush.bf16.msra.mxu0 %v365
    %396 = vmatpush.bf16.msra.mxu0 %v363
    %397 = vmatpush.bf16.msra.mxu0 %v361
    %398 = vmatpush.bf16.msra.mxu0 %v359
    %399 = vmatmul.bf16.gmra.mxu0 %v287
    %v400 = vpop.f32.mrf.mxu0
    %v401 = vadd.f32 %v307, %v400
    %v402 = vpop.f32.mrf.mxu0
    %403 = vdwg.mxu0
    %404 = vmatpush.bf16.msra.mxu0 %v374
    %405 = vmatpush.bf16.msra.mxu0 %v372
    %406 = vmatpush.bf16.msra.mxu0 %v370
    %407 = vmatpush.bf16.msra.mxu0 %v368
    %408 = vmatpush.bf16.msra.mxu0 %v366
    %409 = vmatpush.bf16.msra.mxu0 %v364
    %410 = vmatpush.bf16.msra.mxu0 %v362
    %411 = vmatpush.bf16.msra.mxu0 %v360
    %412 = vmatmul.bf16.gmra.mxu0 %v287
    %v413 = vpop.f32.mrf.mxu0
    %v414 = vadd.f32 %v308, %v413
    %v415 = vpop.f32.mrf.mxu0
    %416 = vdwg.mxu0
    %v417 = vmul.f32 %v414, 1.442695
    %v418 = vpow.pop %v417
    %v419 = vrsqrt.pop %v418
    %v420 = vmul.f32 %v419, %v418
    %v421 = vmul.f32 %v420, %v419
    %v422 = vmul.f32 0.5, %v421
    %v423 = vsub.f32 1.5, %v422
    %v424 = vmul.f32 %v419, %v423
    %v425 = vmul.f32 %v418, %v424
    %vm426 = vcmp.eq.f32.partialorder %v418, inf
    %v427 = vsel %vm426, %v418, %v425
    %vm428 = vcmp.eq.f32.partialorder %v418, 0.0
    %v429 = vand.u32 %v418, 2147483648
    %v430 = vsel %vm428, %v429, %v427
    %v431 = vmul.f32 %v305, %v430
    %v432 = vadd.f32 %v431, %v401
    %433 = vst [vmem:[#allocation13] sm:$0xff] %v432
    %v434 = vadd.f32 %v414, 1.0
    %v435 = vmul.f32 %v401, %v401
    %v436 = vsub.f32 %v434, %v435
    %v437 = vsub.f32 %v436, %v418
    %v438 = vlaneseq
    %v439 = vshrl.u32 %v438, 7
    %s440 = smul.u32 0, 8
    %v441 = vstv %s440
    %v442 = vadd.s32 %v439, %v441
    %vm443 = vcmp.lt.s32.totalorder %v442, 8
    %v444 = vsel %vm443, 1, 0
    %vm445 = vcmp.eq.s32.totalorder %v444, 1
    %v446 = vsel %vm445, %v437, 0.0
    %v447 = vrot.slane %v446, 4
    %v448 = vadd.f32 %v446, %v447
    %v449 = vrot.slane %v448, 2
    %v450 = vadd.f32 %v448, %v449
    %v451 = vrot.slane %v450, 1
    %v452 = vadd.f32 %v450, %v451
    %453 = vst [vmem:[#allocation14] sm:$0x1] %v452
    // Predicated region
    $region58: #{tpu_custom_call.1} parent=1 // pred_check
      _
    $region59: #{tpu_custom_call.1} parent=1 // pred_check_branch
      %455 = sbr.rel (0) target = $region61
    $region60: #{tpu_custom_call.1} parent=1 // pred_region
      %457 = vsyncadd [#allocation4], 0
      %s459 = sshll.u32 [#allocation13], 4
      %s460 = int_to_ptr.vmem [resolvable:$true] %s459
      %s461 = sshll.u32 %s8, 4
      %s462 = int_to_ptr.hbm [resolvable:$true] %s461
      %464 = dma.vmem_to_hbm [thread:$0]  %s460, 128, %s462, [#allocation4]
    $region61: #{tpu_custom_call.1} parent=1 // pred_fallthru
      _
    // Predicated region
    $region62: #{tpu_custom_call.1} parent=1 // pred_check
      _
    $region63: #{tpu_custom_call.1} parent=1 // pred_check_branch
      %466 = sbr.rel (0) target = $region65
    $region64: #{tpu_custom_call.1} parent=1 // pred_region
      %468 = vsyncadd [#allocation15], 0
      %s470 = sshll.u32 [#allocation14], 4
      %s471 = int_to_ptr.vmem [resolvable:$true] %s470
      %s472 = sshll.u32 %s9, 4
      %s473 = int_to_ptr.hbm [resolvable:$true] %s472
      %475 = dma.vmem_to_hbm [thread:$0]  %s471, 16, %s473, [#allocation15]
    $region65: #{tpu_custom_call.1} parent=1 // pred_fallthru
      _
    // Predicated region
    $region66: #{tpu_custom_call.1} parent=1 // pred_check
      _
    $region67: #{tpu_custom_call.1} parent=1 // pred_check_branch
      %477 = sbr.rel (0) target = $region69
    $region68: #{tpu_custom_call.1} parent=1 // pred_region
      %479 = dma.done [#allocation4], 128
    $region69: #{tpu_custom_call.1} parent=1 // pred_fallthru
      _
    // Predicated region
    $region70: #{tpu_custom_call.1} parent=1 // pred_check
      _
    $region71: #{tpu_custom_call.1} parent=1 // pred_check_branch
      %481 = sbr.rel (0) target = $region73
    $region72: #{tpu_custom_call.1} parent=1 // pred_region
      %483 = dma.done [#allocation15], 16
    $region73: #{tpu_custom_call.1} parent=1 // pred_fallthru
      _
    %484 = vsyncpa [#allocation3], 1
    %485 = vsyncpa [#allocation6], 1
    %486 = vsyncpa [#allocation9], 1
    %487 = vsyncpa [#allocation12], 1
    %488 = vsyncpa [#allocation4], 1
    %489 = vsyncpa [#allocation15], 1

</llo_original>
